<compile_context>
chip_gen: v5e
topology: v5e:2x2
jax: 0.10.0
libtpu: 0.0.40
codegen_flags: <defaults>
</compile_context>

<pallas_src>
import functools

import jax
import jax.numpy as jnp
from jax.experimental import pallas as pl
from jax.experimental.pallas import tpu as pltpu


def _round_up(x, m):
    return (x + m - 1) // m * m


def mil_fc_mc_kernel(h_ref, w1_ref, b1_ref, w2_ref, b2_ref, probs_ref):
    # fc: Linear(embed, hidden) + ReLU (+ Dropout == identity at inference).
    # h arrives f32; cast to bf16 in VMEM so the MXU runs at its native rate.
    h_bf = h_ref[...].astype(jnp.bfloat16)
    h1 = jnp.dot(h_bf, w1_ref[...], preferred_element_type=jnp.float32)
    h1 = jnp.maximum(h1 + b1_ref[...], 0.0)

    # classifiers: Linear(hidden, n_classes). Also bf16 operands / f32 acc —
    # in f32 this "small" matmul costs as many MXU passes as the big one.
    logits = jnp.dot(h1.astype(jnp.bfloat16), w2_ref[...],
                     preferred_element_type=jnp.float32) + b2_ref[...]

    # Row-wise softmax over the class axis (per-row, so undefined padded rows
    # in the ragged edge block cannot contaminate valid rows).
    mx = jnp.max(logits, axis=-1, keepdims=True)
    e = jnp.exp(logits - mx)
    probs_ref[...] = e / jnp.sum(e, axis=-1, keepdims=True)


def mil_fc_mc_forward(h, w1, b1, w2, b2, n_classes, tile_n=1024,
                      vmem_limit_bytes=48 * 1024 * 1024):
    """Pallas forward for MIL_fc_mc.

    h : (N, embed);  w1: (embed, hidden); b1: (1, hidden);
    w2: (hidden, C); b2: (1, C)   (weights transposed vs. torch Linear).
    Returns (top_instance, Y_prob, Y_hat, y_probs, results_dict) like the module.
    """
    n, embed = h.shape
    hidden = w1.shape[1]
    c = n_classes
    assert c > 2 and w2.shape == (hidden, c)

    # Dtypes at the call boundary: h stays f32 (cast per-tile in VMEM inside
    # the kernel -> no extra HBM convert/pad passes); both weight matrices bf16.
    h = h.astype(jnp.float32)
    w1_bf = w1.astype(jnp.bfloat16)
    w2_bf = w2.astype(jnp.bfloat16)
    b1 = b1.astype(jnp.float32).reshape(1, hidden)
    b2 = b2.astype(jnp.float32).reshape(1, c)

    # ---- tile selection (multiples of 16 for bf16 sublane packing) ---------
    tile_n = max(16, min(int(tile_n), _round_up(n, 16)))
    tile_n = _round_up(tile_n, 16)
    # VMEM budget: double-buffered f32 h tile + its bf16 copy + f32 h1 + its
    # bf16 copy + double-buffered probs tile, plus resident (2x-buffered)
    # weights.  Default limit (48 MiB) is safe on v7x's 64 MiB/TC; raise it on
    # v5e/v6e (128 MiB) for bigger tiles / deeper buffering if needed.
    per_row_bytes = (2 * embed * 4 + embed * 2 + hidden * 4 + hidden * 2
                     + 2 * c * 4)
    weight_bytes = 2 * (embed * hidden * 2 + hidden * 4 + hidden * c * 2 + c * 4)
    budget = vmem_limit_bytes - weight_bytes - (4 << 20)   # scratch headroom
    tile_cap = max(16, (budget // per_row_bytes) // 16 * 16)
    tile_n = min(tile_n, tile_cap)
    # Keep >= 2 grid steps when N allows so a v7x megacore can split the
    # "parallel" axis across its two TensorCores.
    if n > 16:
        tile_n = min(tile_n, max(16, _round_up(pl.cdiv(n, 2), 16)))
    grid = (pl.cdiv(n, tile_n),)
    # TODO(synk): on v7x with multi-MiB weights, pipeline_mode=pl.Buffered(1)
    # on the constant-index-map weight specs would halve their resident VMEM.

    cost = pl.CostEstimate(
        flops=2 * n * embed * hidden + 2 * n * hidden * c,
        transcendentals=n * c,
        bytes_accessed=(n * embed * 4 + embed * hidden * 2 + hidden * 4
                        + hidden * c * 2 + c * 4 + n * c * 4),
    )

    y_probs = pl.pallas_call(
        mil_fc_mc_kernel,
        grid=grid,
        in_specs=[
            pl.BlockSpec((tile_n, embed), lambda i: (i, 0)),   # h tile (pipelined)
            pl.BlockSpec((embed, hidden), lambda i: (0, 0)),   # W1 resident
            pl.BlockSpec((1, hidden), lambda i: (0, 0)),       # b1 resident
            pl.BlockSpec((hidden, c), lambda i: (0, 0)),       # W2 resident
            pl.BlockSpec((1, c), lambda i: (0, 0)),            # b2 resident
        ],
        out_specs=pl.BlockSpec((tile_n, c), lambda i: (i, 0)),  # probs tile
        out_shape=jax.ShapeDtypeStruct((n, c), jnp.float32),
        compiler_params=pltpu.CompilerParams(
            dimension_semantics=("parallel",),
            vmem_limit_bytes=vmem_limit_bytes,
        ),
        cost_estimate=cost,
    )(h, w1_bf, b1, w2_bf, b2)

    # Tiny scalar epilogue (torch: argmax over flattened probs, gather the
    # winning row).  O(N*C) with C=n_classes; fused by XLA around the kernel.
    m = jnp.argmax(y_probs.reshape(-1))
    row = m // c
    col = m % c
    y_prob = jax.lax.dynamic_slice(y_probs, (row, 0), (1, c))
    y_hat = col.reshape(1)

    # Recompute the single winning row's logits (tiny gemv, identical numerics
    # to the kernel) instead of streaming the full (N, C) logits out of VMEM.
    h_row = jax.lax.dynamic_slice(h, (row, 0), (1, embed)).astype(jnp.bfloat16)
    h1_row = jnp.maximum(
        jnp.dot(h_row, w1_bf, preferred_element_type=jnp.float32) + b1, 0.0)
    top_instance = jnp.dot(h1_row.astype(jnp.bfloat16), w2_bf,
                           preferred_element_type=jnp.float32) + b2

    results_dict = {}
    # TODO(synk): return_features=True would also need h1[row]; only the
    # default return_features=False path is implemented.
    return top_instance, y_prob, y_hat, y_probs, results_dict


def reference_forward(h, w1, b1, w2, b2, n_classes):
    # Pure-JAX reference with the same numerics as the kernel path
    # (bf16 operands on both matmuls, f32 accumulation everywhere).
    h1 = jnp.dot(h.astype(jnp.bfloat16), w1.astype(jnp.bfloat16),
                 preferred_element_type=jnp.float32) + b1.reshape(1, -1)
    h1 = jnp.maximum(h1, 0.0)
    logits = jnp.dot(h1.astype(jnp.bfloat16), w2.astype(jnp.bfloat16),
                     preferred_element_type=jnp.float32) + b2.reshape(1, -1)
    y_probs = jax.nn.softmax(logits, axis=1)
    m = jnp.argmax(y_probs.reshape(-1))
    row = m // n_classes
    col = m % n_classes
    return logits[row][None], y_probs[row][None], col.reshape(1), y_probs


if __name__ == "__main__":
    # Small shapes consistent with the module: embed_dim=256 (ctor arg),
    # hidden=512 (fixed by size_dict), n_classes=4 (>2), N=20 instances.
    # tile_n=16 -> 2 grid steps and a ragged edge block (exercises padding).
    N, EMBED, HIDDEN, C = 20, 256, 512, 4

    key = jax.random.PRNGKey(0)
    k_h, k_w1, k_b1, k_w2, k_b2 = jax.random.split(key, 5)
    h = jax.random.normal(k_h, (N, EMBED), dtype=jnp.float32)
    w1 = jax.random.normal(k_w1, (EMBED, HIDDEN), dtype=jnp.float32) * 0.02
    b1 = jax.random.normal(k_b1, (1, HIDDEN), dtype=jnp.float32) * 0.02
    w2 = jax.random.normal(k_w2, (HIDDEN, C), dtype=jnp.float32) * 0.02
    b2 = jax.random.normal(k_b2, (1, C), dtype=jnp.float32) * 0.02

    fwd = jax.jit(functools.partial(mil_fc_mc_forward, n_classes=C, tile_n=16))
    top_instance, Y_prob, Y_hat, y_probs, results_dict = fwd(h, w1, b1, w2, b2)
    jax.block_until_ready((top_instance, Y_prob, Y_hat, y_probs))

    # Sanity check against the pure-JAX reference (same numerics).
    r_top, r_yprob, r_yhat, r_probs = reference_forward(h, w1, b1, w2, b2, C)
    assert y_probs.shape == (N, C) and top_instance.shape == (1, C)
    assert Y_prob.shape == (1, C) and Y_hat.shape == (1,)
    assert jnp.allclose(y_probs, r_probs, atol=2e-5, rtol=2e-5)
    assert jnp.allclose(top_instance, r_top, atol=2e-4, rtol=2e-4)
    assert jnp.allclose(Y_prob, r_yprob, atol=2e-5, rtol=2e-5)
    assert int(Y_hat[0]) == int(r_yhat[0])

    print("KERNEL_OK")
</pallas_src>

<mosaic_0001>
module attributes {stable_mosaic.version = 11 : i64} {
  func.func @mil_fc_mc_kernel(%arg0: i32, %arg1: memref<16x256xf32, #tpu.memory_space<vmem>>, %arg2: memref<256x512xbf16, #tpu.memory_space<vmem>>, %arg3: memref<1x512xf32, #tpu.memory_space<vmem>>, %arg4: memref<512x4xbf16, #tpu.memory_space<vmem>>, %arg5: memref<1x4xf32, #tpu.memory_space<vmem>>, %arg6: memref<16x4xf32, #tpu.memory_space<vmem>>) attributes {dimension_semantics = [#tpu.dimension_semantics<parallel>], iteration_bounds = array<i64: 2>, scalar_prefetch = 0 : i64, scratch_operands = 0 : i64, tpu.core_type = #tpu.core_type<tc>, window_params = [{transform_indices = @transform_0, window_bounds = array<i64: 16, 256>}, {pipeline_mode = #tpu.pipeline_mode<synchronous>, transform_indices = @transform_1, window_bounds = array<i64: 256, 512>}, {pipeline_mode = #tpu.pipeline_mode<synchronous>, transform_indices = @transform_2, window_bounds = array<i64: 1, 512>}, {pipeline_mode = #tpu.pipeline_mode<synchronous>, transform_indices = @transform_3, window_bounds = array<i64: 512, 4>}, {pipeline_mode = #tpu.pipeline_mode<synchronous>, transform_indices = @transform_4, window_bounds = array<i64: 1, 4>}, {transform_indices = @transform_5, window_bounds = array<i64: 16, 4>}]} {
    %c0 = arith.constant 0 : index
    %c0_0 = arith.constant 0 : index
    %0 = vector.load %arg1[%c0, %c0_0] : memref<16x256xf32, #tpu.memory_space<vmem>>, vector<16x256xf32>
    %1 = arith.truncf %0 : vector<16x256xf32> to vector<16x256xbf16>
    %c0_1 = arith.constant 0 : index
    %c0_2 = arith.constant 0 : index
    %2 = vector.load %arg2[%c0_1, %c0_2] : memref<256x512xbf16, #tpu.memory_space<vmem>>, vector<256x512xbf16>
    %cst = arith.constant dense<0.000000e+00> : vector<16x512xf32>
    %3 = tpu.matmul %1, %2, %cst {dimension_numbers = #tpu.dot_dimension_numbers<[1], [0], [0], [1], [0, 0, 1, 1], [], []>} : vector<16x256xbf16>, vector<256x512xbf16>, vector<16x512xf32> -> vector<16x512xf32>
    %c0_3 = arith.constant 0 : index
    %c0_4 = arith.constant 0 : index
    %4 = vector.load %arg3[%c0_3, %c0_4] : memref<1x512xf32, #tpu.memory_space<vmem>>, vector<1x512xf32>
    %5 = vector.broadcast %4 : vector<1x512xf32> to vector<16x512xf32>
    %6 = arith.addf %3, %5 : vector<16x512xf32>
    %cst_5 = arith.constant 0.000000e+00 : f32
    %7 = vector.broadcast %cst_5 : f32 to vector<16x512xf32>
    %8 = arith.maximumf %6, %7 : vector<16x512xf32>
    %9 = arith.truncf %8 : vector<16x512xf32> to vector<16x512xbf16>
    %c0_6 = arith.constant 0 : index
    %c0_7 = arith.constant 0 : index
    %10 = vector.load %arg4[%c0_6, %c0_7] : memref<512x4xbf16, #tpu.memory_space<vmem>>, vector<512x4xbf16>
    %cst_8 = arith.constant dense<0.000000e+00> : vector<16x4xf32>
    %11 = tpu.matmul %9, %10, %cst_8 {dimension_numbers = #tpu.dot_dimension_numbers<[1], [0], [0], [1], [0, 0, 1, 1], [], []>} : vector<16x512xbf16>, vector<512x4xbf16>, vector<16x4xf32> -> vector<16x4xf32>
    %c0_9 = arith.constant 0 : index
    %c0_10 = arith.constant 0 : index
    %12 = vector.load %arg5[%c0_9, %c0_10] : memref<1x4xf32, #tpu.memory_space<vmem>>, vector<1x4xf32>
    %13 = vector.broadcast %12 : vector<1x4xf32> to vector<16x4xf32>
    %14 = arith.addf %11, %13 : vector<16x4xf32>
    %cst_11 = arith.constant dense<0xFF800000> : vector<16xf32>
    %15 = vector.multi_reduction <maximumf>, %14, %cst_11 [1] : vector<16x4xf32> to vector<16xf32>
    %16 = vector.shape_cast %15 : vector<16xf32> to vector<16x1xf32>
    %17 = vector.broadcast %16 : vector<16x1xf32> to vector<16x4xf32>
    %18 = arith.subf %14, %17 : vector<16x4xf32>
    %19 = math.exp %18 : vector<16x4xf32>
    %cst_12 = arith.constant dense<0.000000e+00> : vector<16xf32>
    %20 = vector.multi_reduction <add>, %19, %cst_12 [1] : vector<16x4xf32> to vector<16xf32>
    %21 = vector.shape_cast %20 : vector<16xf32> to vector<16x1xf32>
    %22 = vector.broadcast %21 : vector<16x1xf32> to vector<16x4xf32>
    %23 = arith.divf %19, %22 : vector<16x4xf32>
    %c0_13 = arith.constant 0 : index
    %c0_14 = arith.constant 0 : index
    %24 = vector.load %arg6[%c0_13, %c0_14] : memref<16x4xf32, #tpu.memory_space<vmem>>, vector<16x4xf32>
    tpu.vector_store %arg6[%c0_13, %c0_14], %23 {strides = array<i32>} : memref<16x4xf32, #tpu.memory_space<vmem>>, vector<16x4xf32>,
    return
  }
  func.func @transform_0(%arg0: i32) -> (i32, i32) {
    %c0_i32 = arith.constant 0 : i32
    %c0_i32_0 = arith.constant 0 : i32
    return %arg0, %c0_i32 : i32, i32
  }
  func.func @transform_1(%arg0: i32) -> (i32, i32) {
    %c0_i32 = arith.constant 0 : i32
    %c0_i32_0 = arith.constant 0 : i32
    %c0_i32_1 = arith.constant 0 : i32
    return %c0_i32, %c0_i32_0 : i32, i32
  }
  func.func @transform_2(%arg0: i32) -> (i32, i32) {
    %c0_i32 = arith.constant 0 : i32
    %c0_i32_0 = arith.constant 0 : i32
    %c0_i32_1 = arith.constant 0 : i32
    return %c0_i32, %c0_i32_0 : i32, i32
  }
  func.func @transform_3(%arg0: i32) -> (i32, i32) {
    %c0_i32 = arith.constant 0 : i32
    %c0_i32_0 = arith.constant 0 : i32
    %c0_i32_1 = arith.constant 0 : i32
    return %c0_i32, %c0_i32_0 : i32, i32
  }
  func.func @transform_4(%arg0: i32) -> (i32, i32) {
    %c0_i32 = arith.constant 0 : i32
    %c0_i32_0 = arith.constant 0 : i32
    %c0_i32_1 = arith.constant 0 : i32
    return %c0_i32, %c0_i32_0 : i32, i32
  }
  func.func @transform_5(%arg0: i32) -> (i32, i32) {
    %c0_i32 = arith.constant 0 : i32
    %c0_i32_0 = arith.constant 0 : i32
    return %arg0, %c0_i32 : i32, i32
  }
}

</mosaic_0001>

<llo_original>
// kernel: mil_fc_mc_forward.1
$region0: #{mil_fc_mc_forward.1}
  #allocation0 [shape = 'u32[]', space=smem, size = 0x4, offset = 0x4, fixed_abs, tag = 'smem constant byte address 0x4 - core index']
  #allocation1 [shape = 'u32[72,128]{1,0:T(1,128)}', space=vmem, size = 0x9000, scoped, tag = 'internal scratch']
  %s0 = inlined_call_operand.vmem [shape: f32[20,256], index: 0, kind: input, shape index: {}]
  %s1 = inlined_call_operand.vmem [shape: bf16[256,512], index: 1, kind: input, shape index: {}]
  %s2 = inlined_call_operand.vmem [shape: f32[1,512], index: 2, kind: input, shape index: {}]
  %s3 = inlined_call_operand.vmem [shape: bf16[512,4], index: 3, kind: input, shape index: {}]
  %s4 = inlined_call_operand.vmem [shape: f32[1,4], index: 4, kind: input, shape index: {}]
  %s5 = inlined_call_operand.vmem [shape: f32[20,4], index: 5, kind: output, shape index: {}]
  %s6 = sld [smem:[#allocation0]]
  $region101: #{mil_fc_mc_forward.1} parent=0
    _
  %s8 = ssub.s32 1, %s6
  %s9 = scalar_select 0, %s8, %s6
  $region1: #{mil_fc_mc_forward.1} parent=0
    #allocation2 [shape = 'u8[16384]{0}', space=vmem, size = 0x4000, scoped, tag = 'output window, operand 0']
    loop: start=0, step=1, limit=4
    $region2: #{mil_fc_mc_forward.1} parent=1 // loop_pre_header
      _
    $region3: #{mil_fc_mc_forward.1} parent=1 // loop_header
      %s11 = sphi 0, %s15
      %p12 = scmp.ge.s32.totalorder %s11, 4
      %s21 = sphi 0, %s23
      %s24 = sphi 0, %s21
      %s25 = sphi 0, %s24
      %s41 = sphi 0, %s25
      %s45 = sphi 0, %s45
      %s47 = sphi 0, %s45
      %s48 = sphi 0, %s47
      %s62 = sphi 0, %s48
      %s66 = sphi 0, %s66
      %s68 = sphi 0, %s66
      %s69 = sphi 0, %s68
      %s83 = sphi 0, %s69
      %s87 = sphi 0, %s87
      %s89 = sphi 0, %s87
      %s90 = sphi 0, %s89
      %s104 = sphi 0, %s90
      %s108 = sphi 0, %s108
      %s110 = sphi 0, %s108
      %s111 = sphi 0, %s110
      %s125 = sphi 0, %s111
      %s131 = sphi 0, %s133
      %s134 = sphi 0, %s131
      %s135 = sphi 0, %s134
      %s151 = sphi 0, %s135
    $region4: #{mil_fc_mc_forward.1} parent=1 // loop_header_branch
      %14 = sbr.rel (%p12) target = $region8
    $region5: #{mil_fc_mc_forward.1} parent=1 // loop_body
      %s16 = ssub.s32 %s11, 1
      %s17 = ssub.s32 %s11, 2
      %s18 = sadd.s32 %s11, 1
      %s19 = ssub.s32 %s11, %s18
      %p20 = scmp.eq.s32.totalorder %s19, 0
      %s22 = sadd.s32 %s21, 1
      %s23 = scalar_select %p20, %s21, %s22
      %p26 = pneg %p20
      %p27 = scmp.eq.s32.totalorder %s11, 1
      %p28 = por %p26, %p27
      %p29 = scmp.ne.s32.totalorder %s21, %s24
      %p30 = scmp.eq.s32.totalorder %s11, 0
      %p31 = por %p29, %p30
      %p32 = scmp.ne.s32.totalorder %s21, %s24
      %p33 = scmp.eq.s32.totalorder %s16, 1
      %p34 = por %p32, %p33
      %p35 = scmp.ne.s32.totalorder %s24, %s25
      %p36 = scmp.eq.s32.totalorder %s16, 0
      %p37 = por %p35, %p36
      %p38 = scmp.ne.s32.totalorder %s24, %s25
      %p39 = scmp.eq.s32.totalorder %s17, 1
      %p40 = por %p38, %p39
      %p42 = scmp.ne.s32.totalorder %s25, %s41
      %p43 = scmp.eq.s32.totalorder %s17, 0
      %p44 = por %p42, %p43
      %s46 = sadd.s32 %s45, 1
      %p49 = scmp.eq.s32.totalorder %s11, 1
      %p50 = scmp.ne.s32.totalorder %s45, %s47
      %p51 = scmp.eq.s32.totalorder %s11, 0
      %p52 = por %p50, %p51
      %p53 = scmp.ne.s32.totalorder %s45, %s47
      %p54 = scmp.eq.s32.totalorder %s16, 1
      %p55 = por %p53, %p54
      %p56 = scmp.ne.s32.totalorder %s47, %s48
      %p57 = scmp.eq.s32.totalorder %s16, 0
      %p58 = por %p56, %p57
      %p59 = scmp.ne.s32.totalorder %s47, %s48
      %p60 = scmp.eq.s32.totalorder %s17, 1
      %p61 = por %p59, %p60
      %p63 = scmp.ne.s32.totalorder %s48, %s62
      %p64 = scmp.eq.s32.totalorder %s17, 0
      %p65 = por %p63, %p64
      %s67 = sadd.s32 %s66, 1
      %p70 = scmp.eq.s32.totalorder %s11, 1
      %p71 = scmp.ne.s32.totalorder %s66, %s68
      %p72 = scmp.eq.s32.totalorder %s11, 0
      %p73 = por %p71, %p72
      %p74 = scmp.ne.s32.totalorder %s66, %s68
      %p75 = scmp.eq.s32.totalorder %s16, 1
      %p76 = por %p74, %p75
      %p77 = scmp.ne.s32.totalorder %s68, %s69
      %p78 = scmp.eq.s32.totalorder %s16, 0
      %p79 = por %p77, %p78
      %p80 = scmp.ne.s32.totalorder %s68, %s69
      %p81 = scmp.eq.s32.totalorder %s17, 1
      %p82 = por %p80, %p81
      %p84 = scmp.ne.s32.totalorder %s69, %s83
      %p85 = scmp.eq.s32.totalorder %s17, 0
      %p86 = por %p84, %p85
      %s88 = sadd.s32 %s87, 1
      %p91 = scmp.eq.s32.totalorder %s11, 1
      %p92 = scmp.ne.s32.totalorder %s87, %s89
      %p93 = scmp.eq.s32.totalorder %s11, 0
      %p94 = por %p92, %p93
      %p95 = scmp.ne.s32.totalorder %s87, %s89
      %p96 = scmp.eq.s32.totalorder %s16, 1
      %p97 = por %p95, %p96
      %p98 = scmp.ne.s32.totalorder %s89, %s90
      %p99 = scmp.eq.s32.totalorder %s16, 0
      %p100 = por %p98, %p99
      %p101 = scmp.ne.s32.totalorder %s89, %s90
      %p102 = scmp.eq.s32.totalorder %s17, 1
      %p103 = por %p101, %p102
      %p105 = scmp.ne.s32.totalorder %s90, %s104
      %p106 = scmp.eq.s32.totalorder %s17, 0
      %p107 = por %p105, %p106
      %s109 = sadd.s32 %s108, 1
      %p112 = scmp.eq.s32.totalorder %s11, 1
      %p113 = scmp.ne.s32.totalorder %s108, %s110
      %p114 = scmp.eq.s32.totalorder %s11, 0
      %p115 = por %p113, %p114
      %p116 = scmp.ne.s32.totalorder %s108, %s110
      %p117 = scmp.eq.s32.totalorder %s16, 1
      %p118 = por %p116, %p117
      %p119 = scmp.ne.s32.totalorder %s110, %s111
      %p120 = scmp.eq.s32.totalorder %s16, 0
      %p121 = por %p119, %p120
      %p122 = scmp.ne.s32.totalorder %s110, %s111
      %p123 = scmp.eq.s32.totalorder %s17, 1
      %p124 = por %p122, %p123
      %p126 = scmp.ne.s32.totalorder %s111, %s125
      %p127 = scmp.eq.s32.totalorder %s17, 0
      %p128 = por %p126, %p127
      %s129 = ssub.s32 %s11, %s18
      %p130 = scmp.eq.s32.totalorder %s129, 0
      %s132 = sadd.s32 %s131, 1
      %s133 = scalar_select %p130, %s131, %s132
      %p136 = pneg %p130
      %p137 = scmp.eq.s32.totalorder %s11, 1
      %p138 = por %p136, %p137
      %p139 = scmp.ne.s32.totalorder %s131, %s134
      %p140 = scmp.eq.s32.totalorder %s11, 0
      %p141 = por %p139, %p140
      %p142 = scmp.ne.s32.totalorder %s131, %s134
      %p143 = scmp.eq.s32.totalorder %s16, 1
      %p144 = por %p142, %p143
      %p145 = scmp.ne.s32.totalorder %s134, %s135
      %p146 = scmp.eq.s32.totalorder %s16, 0
      %p147 = por %p145, %p146
      %p148 = scmp.ne.s32.totalorder %s134, %s135
      %p149 = scmp.eq.s32.totalorder %s17, 1
      %p150 = por %p148, %p149
      %p152 = scmp.ne.s32.totalorder %s135, %s151
      %p153 = scmp.eq.s32.totalorder %s17, 0
      %p154 = por %p152, %p153
      %p155 = scmp.le.s32.totalorder 1, %s11
      %p156 = scmp.lt.s32.totalorder %s11, 3
      %p157 = pnand %p155, %p156
      %p158 = pneg %p157
      // Predicated region
      $region9: #{mil_fc_mc_forward.1} parent=5 // pred_check
        _
      $region10: #{mil_fc_mc_forward.1} parent=5 // pred_check_branch
        %160 = sbr.rel (%p157) target = $region12
      $region11: #{mil_fc_mc_forward.1} parent=5 // pred_region
        %s161 = ssub.s32 %s11, 1
        // Predicated region
        $region13: #{mil_fc_mc_forward.1} parent=11 // pred_check
          %p162 = pneg %p58
        $region14: #{mil_fc_mc_forward.1} parent=11 // pred_check_branch
          %164 = sbr.rel (%p162) target = $region16
        $region15: #{mil_fc_mc_forward.1} parent=11 // pred_region
          _
        $region16: #{mil_fc_mc_forward.1} parent=11 // pred_fallthru
          _
        // Predicated region
        $region17: #{mil_fc_mc_forward.1} parent=11 // pred_check
          %p165 = pneg %p79
        $region18: #{mil_fc_mc_forward.1} parent=11 // pred_check_branch
          %167 = sbr.rel (%p165) target = $region20
        $region19: #{mil_fc_mc_forward.1} parent=11 // pred_region
          _
        $region20: #{mil_fc_mc_forward.1} parent=11 // pred_fallthru
          _
        // Predicated region
        $region21: #{mil_fc_mc_forward.1} parent=11 // pred_check
          %p168 = pneg %p100
        $region22: #{mil_fc_mc_forward.1} parent=11 // pred_check_branch
          %170 = sbr.rel (%p168) target = $region24
        $region23: #{mil_fc_mc_forward.1} parent=11 // pred_region
          _
        $region24: #{mil_fc_mc_forward.1} parent=11 // pred_fallthru
          _
        // Predicated region
        $region25: #{mil_fc_mc_forward.1} parent=11 // pred_check
          %p171 = pneg %p121
        $region26: #{mil_fc_mc_forward.1} parent=11 // pred_check_branch
          %173 = sbr.rel (%p171) target = $region28
        $region27: #{mil_fc_mc_forward.1} parent=11 // pred_region
          _
        $region28: #{mil_fc_mc_forward.1} parent=11 // pred_fallthru
          _
      $region12: #{mil_fc_mc_forward.1} parent=5 // pred_fallthru
        _
      %p174 = scmp.lt.s32.totalorder %s11, 2
      // Predicated region
      $region29: #{mil_fc_mc_forward.1} parent=5 // pred_check
        %p175 = pneg %p174
      $region30: #{mil_fc_mc_forward.1} parent=5 // pred_check_branch
        %177 = sbr.rel (%p175) target = $region32
      $region31: #{mil_fc_mc_forward.1} parent=5 // pred_region
        // Predicated region
        $region33: #{mil_fc_mc_forward.1} parent=31 // pred_check
          %p178 = pneg %p31
        $region34: #{mil_fc_mc_forward.1} parent=31 // pred_check_branch
          %180 = sbr.rel (%p178) target = $region36
        $region35: #{mil_fc_mc_forward.1} parent=31 // pred_region
          %s181 = smul.u32 2, %s11
          %s182 = ssub.s32 3, %s181
          %p183 = scmp.lt.s32.totalorder %s182, 2
          %s184 = scalar_select %p183, %s182, 2
          %s185 = smul.u32 8, %s184
          %s186 = smul.u32 %s185, 2
          %p187 = scmp.lt.s32.totalorder %s181, 2
          %s188 = scalar_select %p187, %s181, 2
          %s189 = smul.addr %s188, 2
          %s190 = smul.addr %s189, 8
          %s191 = scalar_lea.vmem %s0, %s190
          %s192 = smul.u32 2, %s11
          %s193 = ssub.s32 3, %s192
          %p194 = scmp.lt.s32.totalorder %s193, 2
          %s195 = scalar_select %p194, %s193, 2
          %s196 = smul.u32 8, %s195
          %s197 = smul.u32 %s196, 2
        $region36: #{mil_fc_mc_forward.1} parent=31 // pred_fallthru
          _
      $region32: #{mil_fc_mc_forward.1} parent=5 // pred_fallthru
        _
      %p198 = scmp.le.s32.totalorder 1, %s11
      %p199 = scmp.lt.s32.totalorder %s11, 3
      %p200 = pnand %p198, %p199
      %p201 = pneg %p200
      // Predicated region
      $region37: #{mil_fc_mc_forward.1} parent=5 // pred_check
        _
      $region38: #{mil_fc_mc_forward.1} parent=5 // pred_check_branch
        %203 = sbr.rel (%p200) target = $region40
      $region39: #{mil_fc_mc_forward.1} parent=5 // pred_region
        %s204 = ssub.s32 %s11, 1
        %s205 = smul.u32 2, %s16
        %s206 = ssub.s32 3, %s205
        %p207 = scmp.lt.s32.totalorder %s206, 2
        %s208 = scalar_select %p207, %s206, 2
        %s209 = smul.u32 8, %s208
        %s210 = smul.u32 %s209, 2
        %p211 = scmp.lt.s32.totalorder %s205, 2
        %s212 = scalar_select %p211, %s205, 2
        %s213 = smul.addr %s212, 2
        %s214 = smul.addr %s213, 8
        %s215 = scalar_lea.vmem %s0, %s214
        %p216 = pneg %p37
        %p217 = pneg %p34
        %p218 = pneg %p58
        %p219 = pneg %p55
        %p220 = pneg %p79
        %p221 = pneg %p76
        %p222 = pneg %p100
        %p223 = pneg %p97
        %p224 = pneg %p121
        %p225 = pneg %p118
        %p226 = pneg %p147
        %p227 = pneg %p144
        %s228 = sand.u32 %s134, 1
        %s229 = sand.u32 %s134, 1
        %s230 = smul.addr %s229, 16
        %s231 = scalar_lea.vmem [#allocation2], %s230
        %s232 = smul.u32 2, %s16
        %s233 = ssub.s32 3, %s232
        %p234 = scmp.lt.s32.totalorder %s233, 2
        %s235 = scalar_select %p234, %s233, 2
        %s236 = smul.u32 8, %s235
        %s237 = smul.u32 %s236, 2
        %p238 = scmp.lt.s32.totalorder %s232, 2
        %s239 = scalar_select %p238, %s232, 2
        %s240 = smul.addr %s239, 2
        %s241 = smul.addr %s240, 8
        %s242 = scalar_lea.vmem %s0, %s241
        %s243 = smul.u32 2, %s16
        %s244 = ssub.s32 3, %s243
        %p245 = scmp.lt.s32.totalorder %s244, 2
        %s246 = scalar_select %p245, %s244, 2
        %s247 = smul.u32 8, %s246
        %s248 = smul.u32 %s247, 2
        %s249 = smul.u32 2, %s16
        %s250 = ssub.s32 3, %s249
        %p251 = scmp.lt.s32.totalorder %s250, 2
        %s252 = scalar_select %p251, %s250, 2
        %s253 = smul.u32 8, %s252
        %v254 = vld [vmem:[%s242] sm:$0xff]
        %v255 = vld [vmem:[%s242 + $0x8] sm:$0xff]
        %v256 = vld [vmem:[%s242 + $0x10] sm:$0xff]
        %v257 = vld [vmem:[%s242 + $0x18] sm:$0xff]
        %v258 = vpack.c.bf16 %v256, %v254
        %v259 = vpack.c.bf16 %v257, %v255
        %v260 = vld [vmem:[%s1] sm:$0xff]
        %v261 = vld [vmem:[%s1 + $0x8] sm:$0xff]
        %v262 = vld [vmem:[%s1 + $0x10] sm:$0xff]
        %v263 = vld [vmem:[%s1 + $0x18] sm:$0xff]
        %v264 = vld [vmem:[%s1 + $0x20] sm:$0xff]
        %v265 = vld [vmem:[%s1 + $0x28] sm:$0xff]
        %v266 = vld [vmem:[%s1 + $0x30] sm:$0xff]
        %v267 = vld [vmem:[%s1 + $0x38] sm:$0xff]
        %v268 = vld [vmem:[%s1 + $0x40] sm:$0xff]
        %v269 = vld [vmem:[%s1 + $0x48] sm:$0xff]
        %v270 = vld [vmem:[%s1 + $0x50] sm:$0xff]
        %v271 = vld [vmem:[%s1 + $0x58] sm:$0xff]
        %v272 = vld [vmem:[%s1 + $0x60] sm:$0xff]
        %v273 = vld [vmem:[%s1 + $0x68] sm:$0xff]
        %v274 = vld [vmem:[%s1 + $0x70] sm:$0xff]
        %v275 = vld [vmem:[%s1 + $0x78] sm:$0xff]
        %v276 = vld [vmem:[%s1 + $0x80] sm:$0xff]
        %v277 = vld [vmem:[%s1 + $0x88] sm:$0xff]
        %v278 = vld [vmem:[%s1 + $0x90] sm:$0xff]
        %v279 = vld [vmem:[%s1 + $0x98] sm:$0xff]
        %v280 = vld [vmem:[%s1 + $0xa0] sm:$0xff]
        %v281 = vld [vmem:[%s1 + $0xa8] sm:$0xff]
        %v282 = vld [vmem:[%s1 + $0xb0] sm:$0xff]
        %v283 = vld [vmem:[%s1 + $0xb8] sm:$0xff]
        %v284 = vld [vmem:[%s1 + $0xc0] sm:$0xff]
        %v285 = vld [vmem:[%s1 + $0xc8] sm:$0xff]
        %v286 = vld [vmem:[%s1 + $0xd0] sm:$0xff]
        %v287 = vld [vmem:[%s1 + $0xd8] sm:$0xff]
        %v288 = vld [vmem:[%s1 + $0xe0] sm:$0xff]
        %v289 = vld [vmem:[%s1 + $0xe8] sm:$0xff]
        %v290 = vld [vmem:[%s1 + $0xf0] sm:$0xff]
        %v291 = vld [vmem:[%s1 + $0xf8] sm:$0xff]
        %v292 = vld [vmem:[%s1 + $0x100] sm:$0xff]
        %v293 = vld [vmem:[%s1 + $0x108] sm:$0xff]
        %v294 = vld [vmem:[%s1 + $0x110] sm:$0xff]
        %v295 = vld [vmem:[%s1 + $0x118] sm:$0xff]
        %v296 = vld [vmem:[%s1 + $0x120] sm:$0xff]
        %v297 = vld [vmem:[%s1 + $0x128] sm:$0xff]
        %v298 = vld [vmem:[%s1 + $0x130] sm:$0xff]
        %v299 = vld [vmem:[%s1 + $0x138] sm:$0xff]
        %v300 = vld [vmem:[%s1 + $0x140] sm:$0xff]
        %v301 = vld [vmem:[%s1 + $0x148] sm:$0xff]
        %v302 = vld [vmem:[%s1 + $0x150] sm:$0xff]
        %v303 = vld [vmem:[%s1 + $0x158] sm:$0xff]
        %v304 = vld [vmem:[%s1 + $0x160] sm:$0xff]
        %v305 = vld [vmem:[%s1 + $0x168] sm:$0xff]
        %v306 = vld [vmem:[%s1 + $0x170] sm:$0xff]
        %v307 = vld [vmem:[%s1 + $0x178] sm:$0xff]
        %v308 = vld [vmem:[%s1 + $0x180] sm:$0xff]
        %v309 = vld [vmem:[%s1 + $0x188] sm:$0xff]
        %v310 = vld [vmem:[%s1 + $0x190] sm:$0xff]
        %v311 = vld [vmem:[%s1 + $0x198] sm:$0xff]
        %v312 = vld [vmem:[%s1 + $0x1a0] sm:$0xff]
        %v313 = vld [vmem:[%s1 + $0x1a8] sm:$0xff]
        %v314 = vld [vmem:[%s1 + $0x1b0] sm:$0xff]
        %v315 = vld [vmem:[%s1 + $0x1b8] sm:$0xff]
        %v316 = vld [vmem:[%s1 + $0x1c0] sm:$0xff]
        %v317 = vld [vmem:[%s1 + $0x1c8] sm:$0xff]
        %v318 = vld [vmem:[%s1 + $0x1d0] sm:$0xff]
        %v319 = vld [vmem:[%s1 + $0x1d8] sm:$0xff]
        %v320 = vld [vmem:[%s1 + $0x1e0] sm:$0xff]
        %v321 = vld [vmem:[%s1 + $0x1e8] sm:$0xff]
        %v322 = vld [vmem:[%s1 + $0x1f0] sm:$0xff]
        %v323 = vld [vmem:[%s1 + $0x1f8] sm:$0xff]
        %v324 = vld [vmem:[%s2] sm:$0xf]
        %v326 = vperm.slane %v324, 0
        %v327 = vperm.slane %v324, 1
        %v328 = vperm.slane %v324, 2
        %v329 = vperm.slane %v324, 3
        %v398 = vunpack.c.l.b16 %v260
        %v399 = vunpack.c.h.b16 %v260
        %v400 = vunpack.c.l.b16 %v261
        %v401 = vunpack.c.h.b16 %v261
        %v402 = vunpack.c.l.b16 %v262
        %v403 = vunpack.c.h.b16 %v262
        %v404 = vunpack.c.l.b16 %v263
        %v405 = vunpack.c.h.b16 %v263
        %v406 = vunpack.c.l.b16 %v264
        %v407 = vunpack.c.h.b16 %v264
        %v408 = vunpack.c.l.b16 %v265
        %v409 = vunpack.c.h.b16 %v265
        %v410 = vunpack.c.l.b16 %v266
        %v411 = vunpack.c.h.b16 %v266
        %v412 = vunpack.c.l.b16 %v267
        %v413 = vunpack.c.h.b16 %v267
        %v414 = vunpack.c.l.b16 %v268
        %v415 = vunpack.c.h.b16 %v268
        %v416 = vunpack.c.l.b16 %v269
        %v417 = vunpack.c.h.b16 %v269
        %v418 = vunpack.c.l.b16 %v270
        %v419 = vunpack.c.h.b16 %v270
        %v420 = vunpack.c.l.b16 %v271
        %v421 = vunpack.c.h.b16 %v271
        %v422 = vunpack.c.l.b16 %v272
        %v423 = vunpack.c.h.b16 %v272
        %v424 = vunpack.c.l.b16 %v273
        %v425 = vunpack.c.h.b16 %v273
        %v426 = vunpack.c.l.b16 %v274
        %v427 = vunpack.c.h.b16 %v274
        %v428 = vunpack.c.l.b16 %v275
        %v429 = vunpack.c.h.b16 %v275
        %v430 = vunpack.c.l.b16 %v276
        %v431 = vunpack.c.h.b16 %v276
        %v432 = vunpack.c.l.b16 %v277
        %v433 = vunpack.c.h.b16 %v277
        %v434 = vunpack.c.l.b16 %v278
        %v435 = vunpack.c.h.b16 %v278
        %v436 = vunpack.c.l.b16 %v279
        %v437 = vunpack.c.h.b16 %v279
        %v438 = vunpack.c.l.b16 %v280
        %v439 = vunpack.c.h.b16 %v280
        %v440 = vunpack.c.l.b16 %v281
        %v441 = vunpack.c.h.b16 %v281
        %v442 = vunpack.c.l.b16 %v282
        %v443 = vunpack.c.h.b16 %v282
        %v444 = vunpack.c.l.b16 %v283
        %v445 = vunpack.c.h.b16 %v283
        %v446 = vunpack.c.l.b16 %v284
        %v447 = vunpack.c.h.b16 %v284
        %v448 = vunpack.c.l.b16 %v285
        %v449 = vunpack.c.h.b16 %v285
        %v450 = vunpack.c.l.b16 %v286
        %v451 = vunpack.c.h.b16 %v286
        %v452 = vunpack.c.l.b16 %v287
        %v453 = vunpack.c.h.b16 %v287
        %v454 = vunpack.c.l.b16 %v288
        %v455 = vunpack.c.h.b16 %v288
        %v456 = vunpack.c.l.b16 %v289
        %v457 = vunpack.c.h.b16 %v289
        %v458 = vunpack.c.l.b16 %v290
        %v459 = vunpack.c.h.b16 %v290
        %v460 = vunpack.c.l.b16 %v291
        %v461 = vunpack.c.h.b16 %v291
        %v462 = vunpack.c.l.b16 %v292
        %v463 = vunpack.c.h.b16 %v292
        %v464 = vunpack.c.l.b16 %v293
        %v465 = vunpack.c.h.b16 %v293
        %v466 = vunpack.c.l.b16 %v294
        %v467 = vunpack.c.h.b16 %v294
        %v468 = vunpack.c.l.b16 %v295
        %v469 = vunpack.c.h.b16 %v295
        %v470 = vunpack.c.l.b16 %v296
        %v471 = vunpack.c.h.b16 %v296
        %v472 = vunpack.c.l.b16 %v297
        %v473 = vunpack.c.h.b16 %v297
        %v474 = vunpack.c.l.b16 %v298
        %v475 = vunpack.c.h.b16 %v298
        %v476 = vunpack.c.l.b16 %v299
        %v477 = vunpack.c.h.b16 %v299
        %v478 = vunpack.c.l.b16 %v300
        %v479 = vunpack.c.h.b16 %v300
        %v480 = vunpack.c.l.b16 %v301
        %v481 = vunpack.c.h.b16 %v301
        %v482 = vunpack.c.l.b16 %v302
        %v483 = vunpack.c.h.b16 %v302
        %v484 = vunpack.c.l.b16 %v303
        %v485 = vunpack.c.h.b16 %v303
        %v486 = vunpack.c.l.b16 %v304
        %v487 = vunpack.c.h.b16 %v304
        %v488 = vunpack.c.l.b16 %v305
        %v489 = vunpack.c.h.b16 %v305
        %v490 = vunpack.c.l.b16 %v306
        %v491 = vunpack.c.h.b16 %v306
        %v492 = vunpack.c.l.b16 %v307
        %v493 = vunpack.c.h.b16 %v307
        %v494 = vunpack.c.l.b16 %v308
        %v495 = vunpack.c.h.b16 %v308
        %v496 = vunpack.c.l.b16 %v309
        %v497 = vunpack.c.h.b16 %v309
        %v498 = vunpack.c.l.b16 %v310
        %v499 = vunpack.c.h.b16 %v310
        %v500 = vunpack.c.l.b16 %v311
        %v501 = vunpack.c.h.b16 %v311
        %v502 = vunpack.c.l.b16 %v312
        %v503 = vunpack.c.h.b16 %v312
        %v504 = vunpack.c.l.b16 %v313
        %v505 = vunpack.c.h.b16 %v313
        %v506 = vunpack.c.l.b16 %v314
        %v507 = vunpack.c.h.b16 %v314
        %v508 = vunpack.c.l.b16 %v315
        %v509 = vunpack.c.h.b16 %v315
        %v510 = vunpack.c.l.b16 %v316
        %v511 = vunpack.c.h.b16 %v316
        %v512 = vunpack.c.l.b16 %v317
        %v513 = vunpack.c.h.b16 %v317
        %v514 = vunpack.c.l.b16 %v318
        %v515 = vunpack.c.h.b16 %v318
        %v516 = vunpack.c.l.b16 %v319
        %v517 = vunpack.c.h.b16 %v319
        %v518 = vunpack.c.l.b16 %v320
        %v519 = vunpack.c.h.b16 %v320
        %v520 = vunpack.c.l.b16 %v321
        %v521 = vunpack.c.h.b16 %v321
        %v522 = vunpack.c.l.b16 %v322
        %v523 = vunpack.c.h.b16 %v322
        %v524 = vunpack.c.l.b16 %v323
        %v525 = vunpack.c.h.b16 %v323
        %v526 = vpack.c.b16 %v402, %v398
        %v527 = vpack.c.b16 %v403, %v399
        %v528 = vpack.c.b16 %v404, %v400
        %v529 = vpack.c.b16 %v405, %v401
        %v530 = vpack.c.b16 %v410, %v406
        %v531 = vpack.c.b16 %v411, %v407
        %v532 = vpack.c.b16 %v412, %v408
        %v533 = vpack.c.b16 %v413, %v409
        %v534 = vpack.c.b16 %v418, %v414
        %v535 = vpack.c.b16 %v419, %v415
        %v536 = vpack.c.b16 %v420, %v416
        %v537 = vpack.c.b16 %v421, %v417
        %v538 = vpack.c.b16 %v426, %v422
        %v539 = vpack.c.b16 %v427, %v423
        %v540 = vpack.c.b16 %v428, %v424
        %v541 = vpack.c.b16 %v429, %v425
        %v542 = vpack.c.b16 %v434, %v430
        %v543 = vpack.c.b16 %v435, %v431
        %v544 = vpack.c.b16 %v436, %v432
        %v545 = vpack.c.b16 %v437, %v433
        %v546 = vpack.c.b16 %v442, %v438
        %v547 = vpack.c.b16 %v443, %v439
        %v548 = vpack.c.b16 %v444, %v440
        %v549 = vpack.c.b16 %v445, %v441
        %v550 = vpack.c.b16 %v450, %v446
        %v551 = vpack.c.b16 %v451, %v447
        %v552 = vpack.c.b16 %v452, %v448
        %v553 = vpack.c.b16 %v453, %v449
        %v554 = vpack.c.b16 %v458, %v454
        %v555 = vpack.c.b16 %v459, %v455
        %v556 = vpack.c.b16 %v460, %v456
        %v557 = vpack.c.b16 %v461, %v457
        %v558 = vpack.c.b16 %v466, %v462
        %v559 = vpack.c.b16 %v467, %v463
        %v560 = vpack.c.b16 %v468, %v464
        %v561 = vpack.c.b16 %v469, %v465
        %v562 = vpack.c.b16 %v474, %v470
        %v563 = vpack.c.b16 %v475, %v471
        %v564 = vpack.c.b16 %v476, %v472
        %v565 = vpack.c.b16 %v477, %v473
        %v566 = vpack.c.b16 %v482, %v478
        %v567 = vpack.c.b16 %v483, %v479
        %v568 = vpack.c.b16 %v484, %v480
        %v569 = vpack.c.b16 %v485, %v481
        %v570 = vpack.c.b16 %v490, %v486
        %v571 = vpack.c.b16 %v491, %v487
        %v572 = vpack.c.b16 %v492, %v488
        %v573 = vpack.c.b16 %v493, %v489
        %v574 = vpack.c.b16 %v498, %v494
        %v575 = vpack.c.b16 %v499, %v495
        %v576 = vpack.c.b16 %v500, %v496
        %v577 = vpack.c.b16 %v501, %v497
        %v578 = vpack.c.b16 %v506, %v502
        %v579 = vpack.c.b16 %v507, %v503
        %v580 = vpack.c.b16 %v508, %v504
        %v581 = vpack.c.b16 %v509, %v505
        %v582 = vpack.c.b16 %v514, %v510
        %v583 = vpack.c.b16 %v515, %v511
        %v584 = vpack.c.b16 %v516, %v512
        %v585 = vpack.c.b16 %v517, %v513
        %v586 = vpack.c.b16 %v522, %v518
        %v587 = vpack.c.b16 %v523, %v519
        %v588 = vpack.c.b16 %v524, %v520
        %v589 = vpack.c.b16 %v525, %v521
        %654 = vmatpush.bf16.msra.mxu0 %v554
        %655 = vmatpush.bf16.msra.mxu0 %v550
        %656 = vmatpush.bf16.msra.mxu0 %v546
        %657 = vmatpush.bf16.msra.mxu0 %v542
        %658 = vmatpush.bf16.msra.mxu0 %v538
        %659 = vmatpush.bf16.msra.mxu0 %v534
        %660 = vmatpush.bf16.msra.mxu0 %v530
        %661 = vmatpush.bf16.msra.mxu0 %v526
        %662 = vmatmul.bf16.gmra.mxu0 %v258
        %v663 = vpop.f32.mrf.mxu0
        %v664 = vadd.f32 %v326, %v663
        %v665 = vpop.f32.mrf.mxu0
        %v666 = vadd.f32 %v326, %v665
        %667 = vdwg.mxu0
        %668 = vmatpush.bf16.msra.mxu0 %v586
        %669 = vmatpush.bf16.msra.mxu0 %v582
        %670 = vmatpush.bf16.msra.mxu0 %v578
        %671 = vmatpush.bf16.msra.mxu0 %v574
        %672 = vmatpush.bf16.msra.mxu0 %v570
        %673 = vmatpush.bf16.msra.mxu0 %v566
        %674 = vmatpush.bf16.msra.mxu0 %v562
        %675 = vmatpush.bf16.msra.mxu0 %v558
        %676 = vmatmul.bf16.gmra.mxu0 %v259
        %v677 = vpop.f32.mrf.mxu0
        %v678 = vadd.f32 %v664, %v677
        %v679 = vpop.f32.mrf.mxu0
        %v680 = vadd.f32 %v666, %v679
        %681 = vdwg.mxu0
        %682 = vmatpush.bf16.msra.mxu0 %v555
        %683 = vmatpush.bf16.msra.mxu0 %v551
        %684 = vmatpush.bf16.msra.mxu0 %v547
        %685 = vmatpush.bf16.msra.mxu0 %v543
        %686 = vmatpush.bf16.msra.mxu0 %v539
        %687 = vmatpush.bf16.msra.mxu0 %v535
        %688 = vmatpush.bf16.msra.mxu0 %v531
        %689 = vmatpush.bf16.msra.mxu0 %v527
        %690 = vmatmul.bf16.gmra.mxu0 %v258
        %v691 = vpop.f32.mrf.mxu0
        %v692 = vadd.f32 %v327, %v691
        %v693 = vpop.f32.mrf.mxu0
        %v694 = vadd.f32 %v327, %v693
        %695 = vdwg.mxu0
        %696 = vmatpush.bf16.msra.mxu0 %v587
        %697 = vmatpush.bf16.msra.mxu0 %v583
        %698 = vmatpush.bf16.msra.mxu0 %v579
        %699 = vmatpush.bf16.msra.mxu0 %v575
        %700 = vmatpush.bf16.msra.mxu0 %v571
        %701 = vmatpush.bf16.msra.mxu0 %v567
        %702 = vmatpush.bf16.msra.mxu0 %v563
        %703 = vmatpush.bf16.msra.mxu0 %v559
        %704 = vmatmul.bf16.gmra.mxu0 %v259
        %v705 = vpop.f32.mrf.mxu0
        %v706 = vadd.f32 %v692, %v705
        %v707 = vpop.f32.mrf.mxu0
        %v708 = vadd.f32 %v694, %v707
        %709 = vdwg.mxu0
        %710 = vmatpush.bf16.msra.mxu0 %v556
        %711 = vmatpush.bf16.msra.mxu0 %v552
        %712 = vmatpush.bf16.msra.mxu0 %v548
        %713 = vmatpush.bf16.msra.mxu0 %v544
        %714 = vmatpush.bf16.msra.mxu0 %v540
        %715 = vmatpush.bf16.msra.mxu0 %v536
        %716 = vmatpush.bf16.msra.mxu0 %v532
        %717 = vmatpush.bf16.msra.mxu0 %v528
        %718 = vmatmul.bf16.gmra.mxu0 %v258
        %v719 = vpop.f32.mrf.mxu0
        %v720 = vadd.f32 %v328, %v719
        %v721 = vpop.f32.mrf.mxu0
        %v722 = vadd.f32 %v328, %v721
        %723 = vdwg.mxu0
        %724 = vmatpush.bf16.msra.mxu0 %v588
        %725 = vmatpush.bf16.msra.mxu0 %v584
        %726 = vmatpush.bf16.msra.mxu0 %v580
        %727 = vmatpush.bf16.msra.mxu0 %v576
        %728 = vmatpush.bf16.msra.mxu0 %v572
        %729 = vmatpush.bf16.msra.mxu0 %v568
        %730 = vmatpush.bf16.msra.mxu0 %v564
        %731 = vmatpush.bf16.msra.mxu0 %v560
        %732 = vmatmul.bf16.gmra.mxu0 %v259
        %v733 = vpop.f32.mrf.mxu0
        %v734 = vadd.f32 %v720, %v733
        %v735 = vpop.f32.mrf.mxu0
        %v736 = vadd.f32 %v722, %v735
        %737 = vdwg.mxu0
        %738 = vmatpush.bf16.msra.mxu0 %v557
        %739 = vmatpush.bf16.msra.mxu0 %v553
        %740 = vmatpush.bf16.msra.mxu0 %v549
        %741 = vmatpush.bf16.msra.mxu0 %v545
        %742 = vmatpush.bf16.msra.mxu0 %v541
        %743 = vmatpush.bf16.msra.mxu0 %v537
        %744 = vmatpush.bf16.msra.mxu0 %v533
        %745 = vmatpush.bf16.msra.mxu0 %v529
        %746 = vmatmul.bf16.gmra.mxu0 %v258
        %v747 = vpop.f32.mrf.mxu0
        %v748 = vadd.f32 %v329, %v747
        %v749 = vpop.f32.mrf.mxu0
        %v750 = vadd.f32 %v329, %v749
        %751 = vdwg.mxu0
        %752 = vmatpush.bf16.msra.mxu0 %v589
        %753 = vmatpush.bf16.msra.mxu0 %v585
        %754 = vmatpush.bf16.msra.mxu0 %v581
        %755 = vmatpush.bf16.msra.mxu0 %v577
        %756 = vmatpush.bf16.msra.mxu0 %v573
        %757 = vmatpush.bf16.msra.mxu0 %v569
        %758 = vmatpush.bf16.msra.mxu0 %v565
        %759 = vmatpush.bf16.msra.mxu0 %v561
        %760 = vmatmul.bf16.gmra.mxu0 %v259
        %v761 = vpop.f32.mrf.mxu0
        %v762 = vadd.f32 %v748, %v761
        %v763 = vpop.f32.mrf.mxu0
        %v764 = vadd.f32 %v750, %v763
        %765 = vdwg.mxu0
        %v766 = vmax.f32 %v678, 0.0
        %v767 = vmax.f32 %v706, 0.0
        %v768 = vmax.f32 %v734, 0.0
        %v769 = vmax.f32 %v762, 0.0
        %v770 = vmax.f32 %v680, 0.0
        %v771 = vmax.f32 %v708, 0.0
        %v772 = vmax.f32 %v736, 0.0
        %v773 = vmax.f32 %v764, 0.0
        %v774 = vpack.c.bf16 %v770, %v766
        %v775 = vpack.c.bf16 %v771, %v767
        %v776 = vpack.c.bf16 %v772, %v768
        %v777 = vpack.c.bf16 %v773, %v769
        %v778 = vld [vmem:[%s3] sm:$0xf]
        %v779 = vld [vmem:[%s3 + $0x4] sm:$0xf]
        %v780 = vld [vmem:[%s3 + $0x8] sm:$0xf]
        %v781 = vld [vmem:[%s3 + $0xc] sm:$0xf]
        %v782 = vld [vmem:[%s3 + $0x10] sm:$0xf]
        %v783 = vld [vmem:[%s3 + $0x14] sm:$0xf]
        %v784 = vld [vmem:[%s3 + $0x18] sm:$0xf]
        %v785 = vld [vmem:[%s3 + $0x1c] sm:$0xf]
        %v786 = vld [vmem:[%s3 + $0x20] sm:$0xf]
        %v787 = vld [vmem:[%s3 + $0x24] sm:$0xf]
        %v788 = vld [vmem:[%s3 + $0x28] sm:$0xf]
        %v789 = vld [vmem:[%s3 + $0x2c] sm:$0xf]
        %v790 = vld [vmem:[%s3 + $0x30] sm:$0xf]
        %v791 = vld [vmem:[%s3 + $0x34] sm:$0xf]
        %v792 = vld [vmem:[%s3 + $0x38] sm:$0xf]
        %v793 = vld [vmem:[%s3 + $0x3c] sm:$0xf]
        %v794 = vld [vmem:[%s3 + $0x40] sm:$0xf]
        %v795 = vld [vmem:[%s3 + $0x44] sm:$0xf]
        %v796 = vld [vmem:[%s3 + $0x48] sm:$0xf]
        %v797 = vld [vmem:[%s3 + $0x4c] sm:$0xf]
        %v798 = vld [vmem:[%s3 + $0x50] sm:$0xf]
        %v799 = vld [vmem:[%s3 + $0x54] sm:$0xf]
        %v800 = vld [vmem:[%s3 + $0x58] sm:$0xf]
        %v801 = vld [vmem:[%s3 + $0x5c] sm:$0xf]
        %v802 = vld [vmem:[%s3 + $0x60] sm:$0xf]
        %v803 = vld [vmem:[%s3 + $0x64] sm:$0xf]
        %v804 = vld [vmem:[%s3 + $0x68] sm:$0xf]
        %v805 = vld [vmem:[%s3 + $0x6c] sm:$0xf]
        %v806 = vld [vmem:[%s3 + $0x70] sm:$0xf]
        %v807 = vld [vmem:[%s3 + $0x74] sm:$0xf]
        %v808 = vld [vmem:[%s3 + $0x78] sm:$0xf]
        %v809 = vld [vmem:[%s3 + $0x7c] sm:$0xf]
        %v810 = vld [vmem:[%s3 + $0x80] sm:$0xf]
        %v811 = vld [vmem:[%s3 + $0x84] sm:$0xf]
        %v812 = vld [vmem:[%s3 + $0x88] sm:$0xf]
        %v813 = vld [vmem:[%s3 + $0x8c] sm:$0xf]
        %v814 = vld [vmem:[%s3 + $0x90] sm:$0xf]
        %v815 = vld [vmem:[%s3 + $0x94] sm:$0xf]
        %v816 = vld [vmem:[%s3 + $0x98] sm:$0xf]
        %v817 = vld [vmem:[%s3 + $0x9c] sm:$0xf]
        %v818 = vld [vmem:[%s3 + $0xa0] sm:$0xf]
        %v819 = vld [vmem:[%s3 + $0xa4] sm:$0xf]
        %v820 = vld [vmem:[%s3 + $0xa8] sm:$0xf]
        %v821 = vld [vmem:[%s3 + $0xac] sm:$0xf]
        %v822 = vld [vmem:[%s3 + $0xb0] sm:$0xf]
        %v823 = vld [vmem:[%s3 + $0xb4] sm:$0xf]
        %v824 = vld [vmem:[%s3 + $0xb8] sm:$0xf]
        %v825 = vld [vmem:[%s3 + $0xbc] sm:$0xf]
        %v826 = vld [vmem:[%s3 + $0xc0] sm:$0xf]
        %v827 = vld [vmem:[%s3 + $0xc4] sm:$0xf]
        %v828 = vld [vmem:[%s3 + $0xc8] sm:$0xf]
        %v829 = vld [vmem:[%s3 + $0xcc] sm:$0xf]
        %v830 = vld [vmem:[%s3 + $0xd0] sm:$0xf]
        %v831 = vld [vmem:[%s3 + $0xd4] sm:$0xf]
        %v832 = vld [vmem:[%s3 + $0xd8] sm:$0xf]
        %v833 = vld [vmem:[%s3 + $0xdc] sm:$0xf]
        %v834 = vld [vmem:[%s3 + $0xe0] sm:$0xf]
        %v835 = vld [vmem:[%s3 + $0xe4] sm:$0xf]
        %v836 = vld [vmem:[%s3 + $0xe8] sm:$0xf]
        %v837 = vld [vmem:[%s3 + $0xec] sm:$0xf]
        %v838 = vld [vmem:[%s3 + $0xf0] sm:$0xf]
        %v839 = vld [vmem:[%s3 + $0xf4] sm:$0xf]
        %v840 = vld [vmem:[%s3 + $0xf8] sm:$0xf]
        %v841 = vld [vmem:[%s3 + $0xfc] sm:$0xf]
        %v842 = vld [vmem:[%s4] sm:$0x1]
        %v844 = vperm.slane %v842, 0
        %v910 = vunpack.c.l.b16 %v778
        %v911 = vunpack.c.l.b16 %v779
        %v912 = vunpack.c.l.b16 %v780
        %v913 = vunpack.c.l.b16 %v781
        %v914 = vunpack.c.l.b16 %v782
        %v915 = vunpack.c.l.b16 %v783
        %v916 = vunpack.c.l.b16 %v784
        %v917 = vunpack.c.l.b16 %v785
        %v918 = vunpack.c.l.b16 %v786
        %v919 = vunpack.c.l.b16 %v787
        %v920 = vunpack.c.l.b16 %v788
        %v921 = vunpack.c.l.b16 %v789
        %v922 = vunpack.c.l.b16 %v790
        %v923 = vunpack.c.l.b16 %v791
        %v924 = vunpack.c.l.b16 %v792
        %v925 = vunpack.c.l.b16 %v793
        %v926 = vunpack.c.l.b16 %v794
        %v927 = vunpack.c.l.b16 %v795
        %v928 = vunpack.c.l.b16 %v796
        %v929 = vunpack.c.l.b16 %v797
        %v930 = vunpack.c.l.b16 %v798
        %v931 = vunpack.c.l.b16 %v799
        %v932 = vunpack.c.l.b16 %v800
        %v933 = vunpack.c.l.b16 %v801
        %v934 = vunpack.c.l.b16 %v802
        %v935 = vunpack.c.l.b16 %v803
        %v936 = vunpack.c.l.b16 %v804
        %v937 = vunpack.c.l.b16 %v805
        %v938 = vunpack.c.l.b16 %v806
        %v939 = vunpack.c.l.b16 %v807
        %v940 = vunpack.c.l.b16 %v808
        %v941 = vunpack.c.l.b16 %v809
        %v942 = vunpack.c.l.b16 %v810
        %v943 = vunpack.c.l.b16 %v811
        %v944 = vunpack.c.l.b16 %v812
        %v945 = vunpack.c.l.b16 %v813
        %v946 = vunpack.c.l.b16 %v814
        %v947 = vunpack.c.l.b16 %v815
        %v948 = vunpack.c.l.b16 %v816
        %v949 = vunpack.c.l.b16 %v817
        %v950 = vunpack.c.l.b16 %v818
        %v951 = vunpack.c.l.b16 %v819
        %v952 = vunpack.c.l.b16 %v820
        %v953 = vunpack.c.l.b16 %v821
        %v954 = vunpack.c.l.b16 %v822
        %v955 = vunpack.c.l.b16 %v823
        %v956 = vunpack.c.l.b16 %v824
        %v957 = vunpack.c.l.b16 %v825
        %v958 = vunpack.c.l.b16 %v826
        %v959 = vunpack.c.l.b16 %v827
        %v960 = vunpack.c.l.b16 %v828
        %v961 = vunpack.c.l.b16 %v829
        %v962 = vunpack.c.l.b16 %v830
        %v963 = vunpack.c.l.b16 %v831
        %v964 = vunpack.c.l.b16 %v832
        %v965 = vunpack.c.l.b16 %v833
        %v966 = vunpack.c.l.b16 %v834
        %v967 = vunpack.c.l.b16 %v835
        %v968 = vunpack.c.l.b16 %v836
        %v969 = vunpack.c.l.b16 %v837
        %v970 = vunpack.c.l.b16 %v838
        %v971 = vunpack.c.l.b16 %v839
        %v972 = vunpack.c.l.b16 %v840
        %v973 = vunpack.c.l.b16 %v841
        %v974 = vpack.c.b16 %v911, %v910
        %v975 = vpack.c.b16 %v913, %v912
        %v976 = vpack.c.b16 %v915, %v914
        %v977 = vpack.c.b16 %v917, %v916
        %v978 = vpack.c.b16 %v919, %v918
        %v979 = vpack.c.b16 %v921, %v920
        %v980 = vpack.c.b16 %v923, %v922
        %v981 = vpack.c.b16 %v925, %v924
        %v982 = vpack.c.b16 %v927, %v926
        %v983 = vpack.c.b16 %v929, %v928
        %v984 = vpack.c.b16 %v931, %v930
        %v985 = vpack.c.b16 %v933, %v932
        %v986 = vpack.c.b16 %v935, %v934
        %v987 = vpack.c.b16 %v937, %v936
        %v988 = vpack.c.b16 %v939, %v938
        %v989 = vpack.c.b16 %v941, %v940
        %v990 = vpack.c.b16 %v943, %v942
        %v991 = vpack.c.b16 %v945, %v944
        %v992 = vpack.c.b16 %v947, %v946
        %v993 = vpack.c.b16 %v949, %v948
        %v994 = vpack.c.b16 %v951, %v950
        %v995 = vpack.c.b16 %v953, %v952
        %v996 = vpack.c.b16 %v955, %v954
        %v997 = vpack.c.b16 %v957, %v956
        %v998 = vpack.c.b16 %v959, %v958
        %v999 = vpack.c.b16 %v961, %v960
        %v1000 = vpack.c.b16 %v963, %v962
        %v1001 = vpack.c.b16 %v965, %v964
        %v1002 = vpack.c.b16 %v967, %v966
        %v1003 = vpack.c.b16 %v969, %v968
        %v1004 = vpack.c.b16 %v971, %v970
        %v1005 = vpack.c.b16 %v973, %v972
        %1038 = vmatpush.bf16.msra.mxu0 %v981
        %1039 = vmatpush.bf16.msra.mxu0 %v980
        %1040 = vmatpush.bf16.msra.mxu0 %v979
        %1041 = vmatpush.bf16.msra.mxu0 %v978
        %1042 = vmatpush.bf16.msra.mxu0 %v977
        %1043 = vmatpush.bf16.msra.mxu0 %v976
        %1044 = vmatpush.bf16.msra.mxu0 %v975
        %1045 = vmatpush.bf16.msra.mxu0 %v974
        %1046 = vmatmul.bf16.gmra.mxu0 %v774
        %v1047 = vpop.f32.mrf.mxu0
        %v1048 = vadd.f32 %v844, %v1047
        %v1049 = vpop.f32.mrf.mxu0
        %v1050 = vadd.f32 %v844, %v1049
        %1051 = vdwg.mxu0
        %1052 = vmatpush.bf16.msra.mxu0 %v989
        %1053 = vmatpush.bf16.msra.mxu0 %v988
        %1054 = vmatpush.bf16.msra.mxu0 %v987
        %1055 = vmatpush.bf16.msra.mxu0 %v986
        %1056 = vmatpush.bf16.msra.mxu0 %v985
        %1057 = vmatpush.bf16.msra.mxu0 %v984
        %1058 = vmatpush.bf16.msra.mxu0 %v983
        %1059 = vmatpush.bf16.msra.mxu0 %v982
        %1060 = vmatmul.bf16.gmra.mxu0 %v775
        %v1061 = vpop.f32.mrf.mxu0
        %v1062 = vadd.f32 %v1048, %v1061
        %v1063 = vpop.f32.mrf.mxu0
        %v1064 = vadd.f32 %v1050, %v1063
        %1065 = vdwg.mxu0
        %1066 = vmatpush.bf16.msra.mxu0 %v997
        %1067 = vmatpush.bf16.msra.mxu0 %v996
        %1068 = vmatpush.bf16.msra.mxu0 %v995
        %1069 = vmatpush.bf16.msra.mxu0 %v994
        %1070 = vmatpush.bf16.msra.mxu0 %v993
        %1071 = vmatpush.bf16.msra.mxu0 %v992
        %1072 = vmatpush.bf16.msra.mxu0 %v991
        %1073 = vmatpush.bf16.msra.mxu0 %v990
        %1074 = vmatmul.bf16.gmra.mxu0 %v776
        %v1075 = vpop.f32.mrf.mxu0
        %v1076 = vadd.f32 %v1062, %v1075
        %v1077 = vpop.f32.mrf.mxu0
        %v1078 = vadd.f32 %v1064, %v1077
        %1079 = vdwg.mxu0
        %1080 = vmatpush.bf16.msra.mxu0 %v1005
        %1081 = vmatpush.bf16.msra.mxu0 %v1004
        %1082 = vmatpush.bf16.msra.mxu0 %v1003
        %1083 = vmatpush.bf16.msra.mxu0 %v1002
        %1084 = vmatpush.bf16.msra.mxu0 %v1001
        %1085 = vmatpush.bf16.msra.mxu0 %v1000
        %1086 = vmatpush.bf16.msra.mxu0 %v999
        %1087 = vmatpush.bf16.msra.mxu0 %v998
        %1088 = vmatmul.bf16.gmra.mxu0 %v777
        %v1089 = vpop.f32.mrf.mxu0
        %v1090 = vadd.f32 %v1076, %v1089
        %v1091 = vpop.f32.mrf.mxu0
        %v1092 = vadd.f32 %v1078, %v1091
        %1093 = vdwg.mxu0
        %vm1094 = vcmask 31744
        %v1095 = vsel %vm1094, %v1090, -inf
        %1096 = vmax.xlane.f32.xlu0 %v1095
        %v1097 = vpop.xlane.xlu0 %1096
        %v1098 = vsel %vm1094, %v1092, -inf
        %1099 = vmax.xlane.f32.xlu0 %v1098
        %v1100 = vpop.xlane.xlu0 %1099
        %v1101 = vsub.f32 %v1090, %v1097
        %v1102 = vsub.f32 %v1092, %v1100
        %v1103 = vmul.f32 %v1101, 1.442695
        %v1104 = vpow.pop %v1103
        %v1105 = vmul.f32 %v1102, 1.442695
        %v1106 = vpow.pop %v1105
        %v1107 = vsel %vm1094, %v1104, 0.0
        %1108 = vadd.xlane.f32.xlu0 %v1107
        %v1109 = vpop.xlane.xlu0 %1108
        %v1110 = vsel %vm1094, %v1106, 0.0
        %1111 = vadd.xlane.f32.xlu0 %v1110
        %v1112 = vpop.xlane.xlu0 %1111
        %v1113 = vrcp.pop %v1109
        %v1114 = vmul.f32 %v1109, %v1113
        %v1115 = vsub.f32 1.0, %v1114
        %v1116 = vmul.f32 %v1113, %v1115
        %v1117 = vadd.f32 %v1113, %v1116
        %vm1118 = vweird.f32 %v1109
        %vm1119 = vweird.f32 %v1113
        %vm1120 = vmor %vm1118, %vm1119
        %v1121 = vsel %vm1120, %v1113, %v1117
        %v1122 = vand.u32 2147483647, %v1109
        %vm1123 = vcmp.eq.f32.partialorder %v1122, 8.507059e+37
        %v1124 = vand.u32 %v1109, 2147483648
        %v1125 = vor.u32 1.1754944e-38, %v1124
        %v1126 = vsel %vm1123, %v1125, %v1121
        %v1127 = vmul.f32 %v1104, %v1126
        %v1128 = vrcp.pop %v1112
        %v1129 = vmul.f32 %v1112, %v1128
        %v1130 = vsub.f32 1.0, %v1129
        %v1131 = vmul.f32 %v1128, %v1130
        %v1132 = vadd.f32 %v1128, %v1131
        %vm1133 = vweird.f32 %v1112
        %vm1134 = vweird.f32 %v1128
        %vm1135 = vmor %vm1133, %vm1134
        %v1136 = vsel %vm1135, %v1128, %v1132
        %v1137 = vand.u32 2147483647, %v1112
        %vm1138 = vcmp.eq.f32.partialorder %v1137, 8.507059e+37
        %v1139 = vand.u32 %v1112, 2147483648
        %v1140 = vor.u32 1.1754944e-38, %v1139
        %v1141 = vsel %vm1138, %v1140, %v1136
        %v1142 = vmul.f32 %v1106, %v1141
        %1143 = vst.msk [vmem:[%s231] sm:$0xff] %vm1094, %v1127
        %1144 = vst.msk [vmem:[%s231 + $0x8] sm:$0xff] %vm1094, %v1142
        %s1145 = sand.u32 %s134, 1
        %s1146 = sand.u32 %s134, 1
        %s1147 = smul.addr %s1146, 16
        %s1148 = scalar_lea.vmem [#allocation2], %s1147
        // Predicated region
        $region41: #{mil_fc_mc_forward.1} parent=39 // pred_check
          %p1149 = pneg %p144
        $region42: #{mil_fc_mc_forward.1} parent=39 // pred_check_branch
          %1151 = sbr.rel (%p1149) target = $region44
        $region43: #{mil_fc_mc_forward.1} parent=39 // pred_region
          %s1152 = smul.u32 2, %s16
          %s1153 = ssub.s32 3, %s1152
          %p1154 = scmp.lt.s32.totalorder %s1153, 2
          %s1155 = scalar_select %p1154, %s1153, 2
          %s1156 = smul.u32 8, %s1155
          %p1157 = scmp.ne.s32.totalorder 0, %s1156
          %s1158 = smul.addr %s1152, 8
          %s1159 = scalar_lea.vmem %s5, %s1158
          // Predicated region
          $region45: #{mil_fc_mc_forward.1} parent=43 // pred_check
            %p1160 = pneg %p1157
          $region46: #{mil_fc_mc_forward.1} parent=43 // pred_check_branch
            %1162 = sbr.rel (%p1160) target = $region48
          $region47: #{mil_fc_mc_forward.1} parent=43 // pred_region
            // Predicated region
            $region49: #{mil_fc_mc_forward.1} parent=47 // pred_check
              _
            $region50: #{mil_fc_mc_forward.1} parent=47 // pred_check_branch
              %1164 = sbr.rel (0) target = $region52
            $region51: #{mil_fc_mc_forward.1} parent=47 // pred_region
              // Predicated region
              $region71: #{mil_fc_mc_forward.1} parent=51 // pred_check
                _
              $region72: #{mil_fc_mc_forward.1} parent=51 // pred_check_branch
                %1216 = sbr.rel (0) target = $region74
              $region73: #{mil_fc_mc_forward.1} parent=51 // pred_region
                %s1217 = sshrl.u32 %s1155, 1
                // While loop
                $region75: #{mil_fc_mc_forward.1} parent=73 // loop_pre_header
                  _
                $region76: #{mil_fc_mc_forward.1} parent=73 // loop_header
                  %s1219 = sphi 0, %s1221
                  %p1220 = scmp.ge.s32.totalorder %s1219, %s1217
                  %s1224 = sphi 0, %s1233
                  %s1225 = sphi %s1148, %s1236
                  %s1226 = sphi %s1159, %s1237
                $region77: #{mil_fc_mc_forward.1} parent=73 // loop_header_branch
                  %1223 = sbr.rel (%p1220) target = $region81
                $region78: #{mil_fc_mc_forward.1} parent=73 // loop_body
                  %v1227 = vld [vmem:[%s1225] sm:$0xff]
                  %1228 = vst [vmem:[%s1226] sm:$0xff] %v1227
                  %v1229 = vld [vmem:[%s1225 + $0x8] sm:$0xff]
                  %1230 = vst [vmem:[%s1226 + $0x8] sm:$0xff] %v1229
                  %s1231 = sadd.s32 1, %s1224
                  %p1232 = scmp.ge.s32.totalorder %s1231, %s1217
                  %s1233 = scalar_select %p1232, 0, %s1231
                  %s1234 = smul.u32 %s1233, 16
                  %s1235 = smul.u32 %s1233, 16
                  %s1236 = scalar_lea.vmem %s1148, %s1234 [#allocation2]
                  %s1237 = scalar_lea.vmem %s1159, %s1235
                $region79: #{mil_fc_mc_forward.1} parent=73 // loop_footer
                  %s1221 = sadd.s32 %s1219, 1
                $region80: #{mil_fc_mc_forward.1} parent=73 // loop_footer_branch
                  %1218 = sbr.rel target = $region76
                $region81: #{mil_fc_mc_forward.1} parent=73 // loop_exit
                  _
                %s1238 = sshrl.u32 %s1155, 1
                %s1239 = sand.u32 %s1155, 1
                %s1240 = smul.u32 %s1238, 2
                %s1241 = smul.u32 8, %s1240
                %s1242 = scalar_lea.vmem %s1148, %s1241 [#allocation2]
                %s1243 = smul.u32 8, %s1240
                %s1244 = scalar_lea.vmem %s1159, %s1243
                // While loop
                $region82: #{mil_fc_mc_forward.1} parent=73 // loop_pre_header
                  _
                $region83: #{mil_fc_mc_forward.1} parent=73 // loop_header
                  %s1246 = sphi 0, %s1248
                  %p1247 = scmp.ge.s32.totalorder %s1246, %s1239
                  %s1251 = sphi 0, %s1258
                  %s1252 = sphi %s1242, %s1261
                  %s1253 = sphi %s1244, %s1262
                $region84: #{mil_fc_mc_forward.1} parent=73 // loop_header_branch
                  %1250 = sbr.rel (%p1247) target = $region88
                $region85: #{mil_fc_mc_forward.1} parent=73 // loop_body
                  %v1254 = vld [vmem:[%s1252] sm:$0xff]
                  %1255 = vst [vmem:[%s1253] sm:$0xff] %v1254
                  %s1256 = sadd.s32 1, %s1251
                  %p1257 = scmp.ge.s32.totalorder %s1256, %s1239
                  %s1258 = scalar_select %p1257, 0, %s1256
                  %s1259 = smul.u32 %s1258, 8
                  %s1260 = smul.u32 %s1258, 8
                  %s1261 = scalar_lea.vmem %s1242, %s1259 [#allocation2]
                  %s1262 = scalar_lea.vmem %s1244, %s1260
                $region86: #{mil_fc_mc_forward.1} parent=73 // loop_footer
                  %s1248 = sadd.s32 %s1246, 1
                $region87: #{mil_fc_mc_forward.1} parent=73 // loop_footer_branch
                  %1245 = sbr.rel target = $region83
                $region88: #{mil_fc_mc_forward.1} parent=73 // loop_exit
                  _
              $region74: #{mil_fc_mc_forward.1} parent=51 // pred_fallthru
                _
              // Predicated region
              $region89: #{mil_fc_mc_forward.1} parent=51 // pred_check
                _
              $region90: #{mil_fc_mc_forward.1} parent=51 // pred_check_branch
                %1264 = sbr.rel target = $region92
              $region91: #{mil_fc_mc_forward.1} parent=51 // pred_region
                _
              $region92: #{mil_fc_mc_forward.1} parent=51 // pred_fallthru
                _
            $region52: #{mil_fc_mc_forward.1} parent=47 // pred_fallthru
              _
            // Predicated region
            $region53: #{mil_fc_mc_forward.1} parent=47 // pred_check
              _
            $region54: #{mil_fc_mc_forward.1} parent=47 // pred_check_branch
              %1166 = sbr.rel target = $region56
            $region55: #{mil_fc_mc_forward.1} parent=47 // pred_region
              %s1168 = ssub.s32 256, 1
              %s1169 = sshrl.u32 %s1155, 1
              // While loop
              $region57: #{mil_fc_mc_forward.1} parent=55 // loop_pre_header
                _
              $region58: #{mil_fc_mc_forward.1} parent=55 // loop_header
                %s1171 = sphi 0, %s1173
                %p1172 = scmp.ge.s32.totalorder %s1171, %s1169
                %s1176 = sphi 0, %s1185
                %s1177 = sphi %s1148, %s1188
                %s1178 = sphi %s1159, %s1189
              $region59: #{mil_fc_mc_forward.1} parent=55 // loop_header_branch
                %1175 = sbr.rel (%p1172) target = $region63
              $region60: #{mil_fc_mc_forward.1} parent=55 // loop_body
                %v1179 = vld [vmem:[%s1177] sm:%s1168]
                %1180 = vst [vmem:[%s1178] sm:%s1168] %v1179
                %v1181 = vld [vmem:[%s1177 + $0x8] sm:%s1168]
                %1182 = vst [vmem:[%s1178 + $0x8] sm:%s1168] %v1181
                %s1183 = sadd.s32 1, %s1176
                %p1184 = scmp.ge.s32.totalorder %s1183, %s1169
                %s1185 = scalar_select %p1184, 0, %s1183
                %s1186 = smul.u32 %s1185, 16
                %s1187 = smul.u32 %s1185, 16
                %s1188 = scalar_lea.vmem %s1148, %s1186 [#allocation2]
                %s1189 = scalar_lea.vmem %s1159, %s1187
              $region61: #{mil_fc_mc_forward.1} parent=55 // loop_footer
                %s1173 = sadd.s32 %s1171, 1
              $region62: #{mil_fc_mc_forward.1} parent=55 // loop_footer_branch
                %1170 = sbr.rel target = $region58
              $region63: #{mil_fc_mc_forward.1} parent=55 // loop_exit
                _
              %s1190 = sshrl.u32 %s1155, 1
              %s1191 = sand.u32 %s1155, 1
              %s1192 = smul.u32 %s1190, 2
              %s1193 = smul.u32 8, %s1192
              %s1194 = scalar_lea.vmem %s1148, %s1193 [#allocation2]
              %s1195 = smul.u32 8, %s1192
              %s1196 = scalar_lea.vmem %s1159, %s1195
              // While loop
              $region64: #{mil_fc_mc_forward.1} parent=55 // loop_pre_header
                _
              $region65: #{mil_fc_mc_forward.1} parent=55 // loop_header
                %s1198 = sphi 0, %s1200
                %p1199 = scmp.ge.s32.totalorder %s1198, %s1191
                %s1203 = sphi 0, %s1210
                %s1204 = sphi %s1194, %s1213
                %s1205 = sphi %s1196, %s1214
              $region66: #{mil_fc_mc_forward.1} parent=55 // loop_header_branch
                %1202 = sbr.rel (%p1199) target = $region70
              $region67: #{mil_fc_mc_forward.1} parent=55 // loop_body
                %v1206 = vld [vmem:[%s1204] sm:%s1168]
                %1207 = vst [vmem:[%s1205] sm:%s1168] %v1206
                %s1208 = sadd.s32 1, %s1203
                %p1209 = scmp.ge.s32.totalorder %s1208, %s1191
                %s1210 = scalar_select %p1209, 0, %s1208
                %s1211 = smul.u32 %s1210, 8
                %s1212 = smul.u32 %s1210, 8
                %s1213 = scalar_lea.vmem %s1194, %s1211 [#allocation2]
                %s1214 = scalar_lea.vmem %s1196, %s1212
              $region68: #{mil_fc_mc_forward.1} parent=55 // loop_footer
                %s1200 = sadd.s32 %s1198, 1
              $region69: #{mil_fc_mc_forward.1} parent=55 // loop_footer_branch
                %1197 = sbr.rel target = $region65
              $region70: #{mil_fc_mc_forward.1} parent=55 // loop_exit
                _
            $region56: #{mil_fc_mc_forward.1} parent=47 // pred_fallthru
              _
          $region48: #{mil_fc_mc_forward.1} parent=43 // pred_fallthru
            _
          %1265 = vnop
        $region44: #{mil_fc_mc_forward.1} parent=39 // pred_fallthru
          _
      $region40: #{mil_fc_mc_forward.1} parent=5 // pred_fallthru
        _
      %p1266 = scmp.le.s32.totalorder 2, %s11
      // Predicated region
      $region93: #{mil_fc_mc_forward.1} parent=5 // pred_check
        %p1267 = pneg %p1266
      $region94: #{mil_fc_mc_forward.1} parent=5 // pred_check_branch
        %1269 = sbr.rel (%p1267) target = $region96
      $region95: #{mil_fc_mc_forward.1} parent=5 // pred_region
        %s1270 = ssub.s32 %s11, 2
        // Predicated region
        $region97: #{mil_fc_mc_forward.1} parent=95 // pred_check
          %p1271 = pneg %p150
        $region98: #{mil_fc_mc_forward.1} parent=95 // pred_check_branch
          %1273 = sbr.rel (%p1271) target = $region100
        $region99: #{mil_fc_mc_forward.1} parent=95 // pred_region
          %s1274 = sand.u32 %s135, 1
          %s1275 = sand.u32 %s135, 1
          %s1276 = smul.addr %s1275, 16
          %s1277 = scalar_lea.vmem [#allocation2], %s1276
        $region100: #{mil_fc_mc_forward.1} parent=95 // pred_fallthru
          _
      $region96: #{mil_fc_mc_forward.1} parent=5 // pred_fallthru
        _
    $region6: #{mil_fc_mc_forward.1} parent=1 // loop_footer
      %s15 = sadd.s32 1, %s11
    $region7: #{mil_fc_mc_forward.1} parent=1 // loop_footer_branch
      %10 = sbr.rel target = $region3
    $region8: #{mil_fc_mc_forward.1} parent=1 // loop_exit
      _

</llo_original>
